<compile_context>
chip_gen: v5e
topology: v5e:2x2
jax: 0.10.0
libtpu: 0.0.40
codegen_flags: <defaults>
</compile_context>

<pallas_src>
import functools

import jax
import jax.numpy as jnp
from jax.experimental import pallas as pl
from jax.experimental.pallas import tpu as pltpu


def _round_up(x, m):
    return ((x + m - 1) // m) * m


def policy_kernel(x_ref, w1_ref, b1_ref, w2_ref, b2_ref, w3_ref, b3_ref, o_ref):
    # Layer 1: bf16 MXU matmul, f32 accumulate, bias + ReLU on the VPU.
    h = jnp.dot(x_ref[...], w1_ref[...], preferred_element_type=jnp.float32)
    h = jnp.maximum(h + b1_ref[...], 0.0).astype(jnp.bfloat16)
    # Layer 2: Linear + ReLU.
    h = jnp.dot(h, w2_ref[...], preferred_element_type=jnp.float32)
    h = jnp.maximum(h + b2_ref[...], 0.0).astype(jnp.bfloat16)
    # Output layer: Linear, no activation. Lane-dense (padded to 128) store.
    out = jnp.dot(h, w3_ref[...], preferred_element_type=jnp.float32)
    o_ref[...] = (out + b3_ref[...]).astype(o_ref.dtype)


@functools.partial(jax.jit, static_argnames=("max_tile_b",))
def policy_forward(x, w1, b1, w2, b2, w3, b3, max_tile_b=512):
    batch, obs_dim = x.shape
    hidden_dim = w1.shape[1]
    action_dim = w3.shape[1]

    # Lane-dense padding: every feature dim -> multiple of 128.
    obs_p = _round_up(obs_dim, 128)
    hid_p = _round_up(hidden_dim, 128)
    act_p = _round_up(action_dim, 128)

    # Batch tile: multiple of 8 sublanes, capped at max_tile_b so the
    # double-buffered x/out tiles + resident weights stay well inside the
    # scoped VMEM budget on every TPU generation (v7x: 64 MiB physical).
    tile_b = min(max_tile_b, _round_up(batch, 8))
    b_pad = _round_up(batch, tile_b)
    grid = (b_pad // tile_b,)

    f32, bf16 = jnp.float32, jnp.bfloat16

    # Zero-pad + cast matmul operands to bf16; biases stay f32.
    xp = jnp.zeros((b_pad, obs_p), bf16).at[:batch, :obs_dim].set(x.astype(bf16))
    w1p = jnp.zeros((obs_p, hid_p), bf16).at[:obs_dim, :hidden_dim].set(w1.astype(bf16))
    w2p = jnp.zeros((hid_p, hid_p), bf16).at[:hidden_dim, :hidden_dim].set(w2.astype(bf16))
    w3p = jnp.zeros((hid_p, act_p), bf16).at[:hidden_dim, :action_dim].set(w3.astype(bf16))
    b1p = jnp.zeros((1, hid_p), f32).at[:, :hidden_dim].set(b1.reshape(1, -1).astype(f32))
    b2p = jnp.zeros((1, hid_p), f32).at[:, :hidden_dim].set(b2.reshape(1, -1).astype(f32))
    b3p = jnp.zeros((1, act_p), f32).at[:, :action_dim].set(b3.reshape(1, -1).astype(f32))

    x_spec = pl.BlockSpec((tile_b, obs_p), lambda i: (i, 0))
    out_spec = pl.BlockSpec((tile_b, act_p), lambda i: (i, 0))

    def resident(shape):
        # Same block every grid step -> weights/biases stay VMEM-resident.
        return pl.BlockSpec(shape, lambda i: (0, 0))

    flops = 2 * b_pad * (obs_p * hid_p + hid_p * hid_p + hid_p * act_p)
    bytes_accessed = (
        xp.size * 2
        + b_pad * act_p * 4
        + (w1p.size + w2p.size + w3p.size) * 2
        + (b1p.size + b2p.size + b3p.size) * 4
    )

    # VMEM budget: double-buffered x (bf16) and out (f32) tiles, resident
    # weights/biases, and f32 intermediates, with headroom.
    vmem_bytes = (
        2 * tile_b * obs_p * 2
        + 2 * tile_b * act_p * 4
        + (w1p.size + w2p.size + w3p.size) * 2
        + (b1p.size + b2p.size + b3p.size) * 4
        + 3 * tile_b * hid_p * 4
    )
    vmem_limit = int(min(max(2 * vmem_bytes, 16 << 20), 100 << 20))

    out_padded = pl.pallas_call(
        policy_kernel,
        out_shape=jax.ShapeDtypeStruct((b_pad, act_p), f32),
        grid=grid,
        in_specs=[
            x_spec,
            resident((obs_p, hid_p)),
            resident((1, hid_p)),
            resident((hid_p, hid_p)),
            resident((1, hid_p)),
            resident((hid_p, act_p)),
            resident((1, act_p)),
        ],
        out_specs=out_spec,
        compiler_params=pltpu.CompilerParams(
            dimension_semantics=("parallel",),
            vmem_limit_bytes=vmem_limit,
        ),
        cost_estimate=pl.CostEstimate(
            flops=flops, transcendentals=0, bytes_accessed=bytes_accessed
        ),
    )(xp, w1p, b1p, w2p, b2p, w3p, b3p)

    return out_padded[:batch, :action_dim]


def orthogonal(key, rows, cols):
    """Orthogonal init matching nn.init.orthogonal_ semantics (gain=1)."""
    a = jax.random.normal(key, (max(rows, cols), min(rows, cols)), jnp.float32)
    q, r = jnp.linalg.qr(a)
    q = q * jnp.sign(jnp.diag(r))  # make deterministic / uniform
    if rows < cols:
        q = q.T
    return q[:rows, :cols]


def init_policy_params(key, obs_dim, action_dim, hidden_dim):
    k1, k2, k3 = jax.random.split(key, 3)
    # PyTorch Linear weights are [out, in]; store transposed as [in, out].
    w1 = orthogonal(k1, hidden_dim, obs_dim).T        # [obs_dim, hidden]
    b1 = jnp.zeros((1, hidden_dim), jnp.float32)
    w2 = orthogonal(k2, hidden_dim, hidden_dim).T     # [hidden, hidden]
    b2 = jnp.zeros((1, hidden_dim), jnp.float32)
    w3 = orthogonal(k3, action_dim, hidden_dim).T     # [hidden, action_dim]
    b3 = jnp.zeros((1, action_dim), jnp.float32)
    return w1, b1, w2, b2, w3, b3


if __name__ == "__main__":
    # Small shapes consistent with the module: Policy(obs_dim=16, action_dim=8,
    # hidden_dim=32, hidden_depth=2), batch of 2 observations.
    # NOTE: at batch=2 this call is pure launch/DMA latency; the fused kernel
    # pays off once many observations are batched into one call (>= several
    # hundred rows), which the batch-tiled grid above is built for.
    obs_dim, action_dim, hidden_dim = 16, 8, 32
    batch = 2

    key = jax.random.PRNGKey(0)
    k_obs, k_params = jax.random.split(key)

    obs = jax.random.normal(k_obs, (batch, obs_dim), jnp.float32)
    params = init_policy_params(k_params, obs_dim, action_dim, hidden_dim)

    out = policy_forward(obs, *params)
    jax.block_until_ready(out)
    assert out.shape == (batch, action_dim)

    w1, b1, w2, b2, w3, b3 = params

    # Reference with the same bf16-operand / f32-accumulate math as the kernel.
    xb = obs.astype(jnp.bfloat16)
    hb = jnp.maximum(
        jnp.dot(xb, w1.astype(jnp.bfloat16), preferred_element_type=jnp.float32) + b1, 0.0
    ).astype(jnp.bfloat16)
    hb = jnp.maximum(
        jnp.dot(hb, w2.astype(jnp.bfloat16), preferred_element_type=jnp.float32) + b2, 0.0
    ).astype(jnp.bfloat16)
    ref_bf16 = jnp.dot(hb, w3.astype(jnp.bfloat16), preferred_element_type=jnp.float32) + b3
    assert jnp.allclose(out, ref_bf16, atol=2e-3, rtol=2e-3)

    # Full-f32 PyTorch-equivalent reference (loose tolerance: bf16 operands).
    h32 = jnp.maximum(obs @ w1 + b1, 0.0)
    h32 = jnp.maximum(h32 @ w2 + b2, 0.0)
    ref_f32 = h32 @ w3 + b3
    assert jnp.allclose(out, ref_f32, atol=1e-1, rtol=1e-1)

    print("KERNEL_OK")
</pallas_src>

<mosaic_0001>
module attributes {stable_mosaic.version = 11 : i64} {
  func.func @policy_kernel(%arg0: i32, %arg1: memref<8x128xbf16, #tpu.memory_space<vmem>>, %arg2: memref<128x128xbf16, #tpu.memory_space<vmem>>, %arg3: memref<1x128xf32, #tpu.memory_space<vmem>>, %arg4: memref<128x128xbf16, #tpu.memory_space<vmem>>, %arg5: memref<1x128xf32, #tpu.memory_space<vmem>>, %arg6: memref<128x128xbf16, #tpu.memory_space<vmem>>, %arg7: memref<1x128xf32, #tpu.memory_space<vmem>>, %arg8: memref<8x128xf32, #tpu.memory_space<vmem>>) attributes {dimension_semantics = [#tpu.dimension_semantics<parallel>], iteration_bounds = array<i64: 1>, scalar_prefetch = 0 : i64, scratch_operands = 0 : i64, tpu.core_type = #tpu.core_type<tc>, window_params = [{transform_indices = @transform_0, window_bounds = array<i64: 8, 128>}, {pipeline_mode = #tpu.pipeline_mode<synchronous>, transform_indices = @transform_1, window_bounds = array<i64: 128, 128>}, {pipeline_mode = #tpu.pipeline_mode<synchronous>, transform_indices = @transform_2, window_bounds = array<i64: 1, 128>}, {pipeline_mode = #tpu.pipeline_mode<synchronous>, transform_indices = @transform_3, window_bounds = array<i64: 128, 128>}, {pipeline_mode = #tpu.pipeline_mode<synchronous>, transform_indices = @transform_4, window_bounds = array<i64: 1, 128>}, {pipeline_mode = #tpu.pipeline_mode<synchronous>, transform_indices = @transform_5, window_bounds = array<i64: 128, 128>}, {pipeline_mode = #tpu.pipeline_mode<synchronous>, transform_indices = @transform_6, window_bounds = array<i64: 1, 128>}, {transform_indices = @transform_7, window_bounds = array<i64: 8, 128>}]} {
    %c0 = arith.constant 0 : index
    %c0_0 = arith.constant 0 : index
    %0 = vector.load %arg1[%c0, %c0_0] : memref<8x128xbf16, #tpu.memory_space<vmem>>, vector<8x128xbf16>
    %c0_1 = arith.constant 0 : index
    %c0_2 = arith.constant 0 : index
    %1 = vector.load %arg2[%c0_1, %c0_2] : memref<128x128xbf16, #tpu.memory_space<vmem>>, vector<128x128xbf16>
    %cst = arith.constant dense<0.000000e+00> : vector<8x128xf32>
    %2 = tpu.matmul %0, %1, %cst {dimension_numbers = #tpu.dot_dimension_numbers<[1], [0], [0], [1], [0, 0, 1, 1], [], []>} : vector<8x128xbf16>, vector<128x128xbf16>, vector<8x128xf32> -> vector<8x128xf32>
    %c0_3 = arith.constant 0 : index
    %c0_4 = arith.constant 0 : index
    %3 = vector.load %arg3[%c0_3, %c0_4] : memref<1x128xf32, #tpu.memory_space<vmem>>, vector<1x128xf32>
    %4 = vector.broadcast %3 : vector<1x128xf32> to vector<8x128xf32>
    %5 = arith.addf %2, %4 : vector<8x128xf32>
    %cst_5 = arith.constant 0.000000e+00 : f32
    %6 = vector.broadcast %cst_5 : f32 to vector<8x128xf32>
    %7 = arith.maximumf %5, %6 : vector<8x128xf32>
    %8 = arith.truncf %7 : vector<8x128xf32> to vector<8x128xbf16>
    %c0_6 = arith.constant 0 : index
    %c0_7 = arith.constant 0 : index
    %9 = vector.load %arg4[%c0_6, %c0_7] : memref<128x128xbf16, #tpu.memory_space<vmem>>, vector<128x128xbf16>
    %cst_8 = arith.constant dense<0.000000e+00> : vector<8x128xf32>
    %10 = tpu.matmul %8, %9, %cst_8 {dimension_numbers = #tpu.dot_dimension_numbers<[1], [0], [0], [1], [0, 0, 1, 1], [], []>} : vector<8x128xbf16>, vector<128x128xbf16>, vector<8x128xf32> -> vector<8x128xf32>
    %c0_9 = arith.constant 0 : index
    %c0_10 = arith.constant 0 : index
    %11 = vector.load %arg5[%c0_9, %c0_10] : memref<1x128xf32, #tpu.memory_space<vmem>>, vector<1x128xf32>
    %12 = vector.broadcast %11 : vector<1x128xf32> to vector<8x128xf32>
    %13 = arith.addf %10, %12 : vector<8x128xf32>
    %cst_11 = arith.constant 0.000000e+00 : f32
    %14 = vector.broadcast %cst_11 : f32 to vector<8x128xf32>
    %15 = arith.maximumf %13, %14 : vector<8x128xf32>
    %16 = arith.truncf %15 : vector<8x128xf32> to vector<8x128xbf16>
    %c0_12 = arith.constant 0 : index
    %c0_13 = arith.constant 0 : index
    %17 = vector.load %arg6[%c0_12, %c0_13] : memref<128x128xbf16, #tpu.memory_space<vmem>>, vector<128x128xbf16>
    %cst_14 = arith.constant dense<0.000000e+00> : vector<8x128xf32>
    %18 = tpu.matmul %16, %17, %cst_14 {dimension_numbers = #tpu.dot_dimension_numbers<[1], [0], [0], [1], [0, 0, 1, 1], [], []>} : vector<8x128xbf16>, vector<128x128xbf16>, vector<8x128xf32> -> vector<8x128xf32>
    %c0_15 = arith.constant 0 : index
    %c0_16 = arith.constant 0 : index
    %19 = vector.load %arg7[%c0_15, %c0_16] : memref<1x128xf32, #tpu.memory_space<vmem>>, vector<1x128xf32>
    %20 = vector.broadcast %19 : vector<1x128xf32> to vector<8x128xf32>
    %21 = arith.addf %18, %20 : vector<8x128xf32>
    %c0_17 = arith.constant 0 : index
    %c0_18 = arith.constant 0 : index
    %22 = vector.load %arg8[%c0_17, %c0_18] : memref<8x128xf32, #tpu.memory_space<vmem>>, vector<8x128xf32>
    tpu.vector_store %arg8[%c0_17, %c0_18], %21 {strides = array<i32>} : memref<8x128xf32, #tpu.memory_space<vmem>>, vector<8x128xf32>,
    return
  }
  func.func @transform_0(%arg0: i32) -> (i32, i32) {
    %c0_i32 = arith.constant 0 : i32
    %c0_i32_0 = arith.constant 0 : i32
    return %arg0, %c0_i32 : i32, i32
  }
  func.func @transform_1(%arg0: i32) -> (i32, i32) {
    %c0_i32 = arith.constant 0 : i32
    %c0_i32_0 = arith.constant 0 : i32
    %c0_i32_1 = arith.constant 0 : i32
    return %c0_i32, %c0_i32_0 : i32, i32
  }
  func.func @transform_2(%arg0: i32) -> (i32, i32) {
    %c0_i32 = arith.constant 0 : i32
    %c0_i32_0 = arith.constant 0 : i32
    %c0_i32_1 = arith.constant 0 : i32
    return %c0_i32, %c0_i32_0 : i32, i32
  }
  func.func @transform_3(%arg0: i32) -> (i32, i32) {
    %c0_i32 = arith.constant 0 : i32
    %c0_i32_0 = arith.constant 0 : i32
    %c0_i32_1 = arith.constant 0 : i32
    return %c0_i32, %c0_i32_0 : i32, i32
  }
  func.func @transform_4(%arg0: i32) -> (i32, i32) {
    %c0_i32 = arith.constant 0 : i32
    %c0_i32_0 = arith.constant 0 : i32
    %c0_i32_1 = arith.constant 0 : i32
    return %c0_i32, %c0_i32_0 : i32, i32
  }
  func.func @transform_5(%arg0: i32) -> (i32, i32) {
    %c0_i32 = arith.constant 0 : i32
    %c0_i32_0 = arith.constant 0 : i32
    %c0_i32_1 = arith.constant 0 : i32
    return %c0_i32, %c0_i32_0 : i32, i32
  }
  func.func @transform_6(%arg0: i32) -> (i32, i32) {
    %c0_i32 = arith.constant 0 : i32
    %c0_i32_0 = arith.constant 0 : i32
    %c0_i32_1 = arith.constant 0 : i32
    return %c0_i32, %c0_i32_0 : i32, i32
  }
  func.func @transform_7(%arg0: i32) -> (i32, i32) {
    %c0_i32 = arith.constant 0 : i32
    %c0_i32_0 = arith.constant 0 : i32
    return %arg0, %c0_i32 : i32, i32
  }
}

</mosaic_0001>

<llo_original>
// kernel: policy_forward.1
$region0: #{policy_forward.1}
  #allocation0 [shape = 'u32[]', space=smem, size = 0x4, offset = 0x4, fixed_abs, tag = 'smem constant byte address 0x4 - core index']
  #allocation1 [shape = 'u32[72,128]{1,0:T(1,128)}', space=vmem, size = 0x9000, scoped, tag = 'internal scratch']
  %s0 = inlined_call_operand.vmem [shape: bf16[8,128], index: 0, kind: input, shape index: {}]
  %s1 = inlined_call_operand.vmem [shape: bf16[128,128], index: 1, kind: input, shape index: {}]
  %s2 = inlined_call_operand.vmem [shape: f32[1,128], index: 2, kind: input, shape index: {}]
  %s3 = inlined_call_operand.vmem [shape: bf16[128,128], index: 3, kind: input, shape index: {}]
  %s4 = inlined_call_operand.vmem [shape: f32[1,128], index: 4, kind: input, shape index: {}]
  %s5 = inlined_call_operand.vmem [shape: bf16[128,128], index: 5, kind: input, shape index: {}]
  %s6 = inlined_call_operand.vmem [shape: f32[1,128], index: 6, kind: input, shape index: {}]
  %s7 = inlined_call_operand.vmem [shape: f32[8,128], index: 7, kind: output, shape index: {}]
  %s8 = sld [smem:[#allocation0]]
  $region38: #{policy_forward.1} parent=0
    _
  %s10 = ssub.s32 1, %s8
  %s11 = scalar_select 0, %s10, %s8
  // Predicated region
  $region2: #{policy_forward.1} parent=0 // pred_check
    _
  $region3: #{policy_forward.1} parent=0 // pred_check_branch
    %13 = sbr.rel (0) target = $region5
  $region4: #{policy_forward.1} parent=0 // pred_region
    _
  $region5: #{policy_forward.1} parent=0 // pred_fallthru
    _
  // Predicated region
  $region6: #{policy_forward.1} parent=0 // pred_check
    _
  $region7: #{policy_forward.1} parent=0 // pred_check_branch
    %15 = sbr.rel (0) target = $region9
  $region8: #{policy_forward.1} parent=0 // pred_region
    _
  $region9: #{policy_forward.1} parent=0 // pred_fallthru
    _
  // Predicated region
  $region10: #{policy_forward.1} parent=0 // pred_check
    _
  $region11: #{policy_forward.1} parent=0 // pred_check_branch
    %17 = sbr.rel (0) target = $region13
  $region12: #{policy_forward.1} parent=0 // pred_region
    _
  $region13: #{policy_forward.1} parent=0 // pred_fallthru
    _
  // Predicated region
  $region14: #{policy_forward.1} parent=0 // pred_check
    _
  $region15: #{policy_forward.1} parent=0 // pred_check_branch
    %19 = sbr.rel (0) target = $region17
  $region16: #{policy_forward.1} parent=0 // pred_region
    _
  $region17: #{policy_forward.1} parent=0 // pred_fallthru
    _
  // Predicated region
  $region18: #{policy_forward.1} parent=0 // pred_check
    _
  $region19: #{policy_forward.1} parent=0 // pred_check_branch
    %21 = sbr.rel (0) target = $region21
  $region20: #{policy_forward.1} parent=0 // pred_region
    _
  $region21: #{policy_forward.1} parent=0 // pred_fallthru
    _
  // Predicated region
  $region22: #{policy_forward.1} parent=0 // pred_check
    _
  $region23: #{policy_forward.1} parent=0 // pred_check_branch
    %23 = sbr.rel (0) target = $region25
  $region24: #{policy_forward.1} parent=0 // pred_region
    _
  $region25: #{policy_forward.1} parent=0 // pred_fallthru
    _
  // Predicated region
  $region26: #{policy_forward.1} parent=0 // pred_check
    _
  $region27: #{policy_forward.1} parent=0 // pred_check_branch
    %25 = sbr.rel (0) target = $region29
  $region28: #{policy_forward.1} parent=0 // pred_region
    _
  $region29: #{policy_forward.1} parent=0 // pred_fallthru
    _
  %v26 = vld [vmem:[%s0] sm:$0xf]
  %v27 = vld [vmem:[%s1] sm:$0xf]
  %v28 = vld [vmem:[%s1 + $0x4] sm:$0xf]
  %v29 = vld [vmem:[%s1 + $0x8] sm:$0xf]
  %v30 = vld [vmem:[%s1 + $0xc] sm:$0xf]
  %v31 = vld [vmem:[%s1 + $0x10] sm:$0xf]
  %v32 = vld [vmem:[%s1 + $0x14] sm:$0xf]
  %v33 = vld [vmem:[%s1 + $0x18] sm:$0xf]
  %v34 = vld [vmem:[%s1 + $0x1c] sm:$0xf]
  %v35 = vld [vmem:[%s1 + $0x20] sm:$0xf]
  %v36 = vld [vmem:[%s1 + $0x24] sm:$0xf]
  %v37 = vld [vmem:[%s1 + $0x28] sm:$0xf]
  %v38 = vld [vmem:[%s1 + $0x2c] sm:$0xf]
  %v39 = vld [vmem:[%s1 + $0x30] sm:$0xf]
  %v40 = vld [vmem:[%s1 + $0x34] sm:$0xf]
  %v41 = vld [vmem:[%s1 + $0x38] sm:$0xf]
  %v42 = vld [vmem:[%s1 + $0x3c] sm:$0xf]
  %v43 = vld [vmem:[%s2] sm:$0x1]
  %v45 = vperm.slane %v43, 0
  %v63 = vunpack.c.l.b16 %v27
  %v64 = vunpack.c.l.b16 %v28
  %v65 = vunpack.c.l.b16 %v29
  %v66 = vunpack.c.l.b16 %v30
  %v67 = vunpack.c.l.b16 %v31
  %v68 = vunpack.c.l.b16 %v32
  %v69 = vunpack.c.l.b16 %v33
  %v70 = vunpack.c.l.b16 %v34
  %v71 = vunpack.c.l.b16 %v35
  %v72 = vunpack.c.l.b16 %v36
  %v73 = vunpack.c.l.b16 %v37
  %v74 = vunpack.c.l.b16 %v38
  %v75 = vunpack.c.l.b16 %v39
  %v76 = vunpack.c.l.b16 %v40
  %v77 = vunpack.c.l.b16 %v41
  %v78 = vunpack.c.l.b16 %v42
  %v79 = vpack.c.b16 %v64, %v63
  %v80 = vpack.c.b16 %v66, %v65
  %v81 = vpack.c.b16 %v68, %v67
  %v82 = vpack.c.b16 %v70, %v69
  %v83 = vpack.c.b16 %v72, %v71
  %v84 = vpack.c.b16 %v74, %v73
  %v85 = vpack.c.b16 %v76, %v75
  %v86 = vpack.c.b16 %v78, %v77
  %95 = vmatpush.bf16.msra.mxu0 %v86
  %96 = vmatpush.bf16.msra.mxu0 %v85
  %97 = vmatpush.bf16.msra.mxu0 %v84
  %98 = vmatpush.bf16.msra.mxu0 %v83
  %99 = vmatpush.bf16.msra.mxu0 %v82
  %100 = vmatpush.bf16.msra.mxu0 %v81
  %101 = vmatpush.bf16.msra.mxu0 %v80
  %102 = vmatpush.bf16.msra.mxu0 %v79
  %103 = vmatmul.bf16.gmra.mxu0 %v26
  %v104 = vpop.f32.mrf.mxu0
  %v105 = vadd.f32 %v45, %v104
  %v106 = vpop.f32.mrf.mxu0
  %107 = vdwg.mxu0
  %v108 = vmax.f32 %v105, 0.0
  %v109 = vpack.c.bf16 %v108, %v108
  %v110 = vld [vmem:[%s3] sm:$0xf]
  %v111 = vld [vmem:[%s3 + $0x4] sm:$0xf]
  %v112 = vld [vmem:[%s3 + $0x8] sm:$0xf]
  %v113 = vld [vmem:[%s3 + $0xc] sm:$0xf]
  %v114 = vld [vmem:[%s3 + $0x10] sm:$0xf]
  %v115 = vld [vmem:[%s3 + $0x14] sm:$0xf]
  %v116 = vld [vmem:[%s3 + $0x18] sm:$0xf]
  %v117 = vld [vmem:[%s3 + $0x1c] sm:$0xf]
  %v118 = vld [vmem:[%s3 + $0x20] sm:$0xf]
  %v119 = vld [vmem:[%s3 + $0x24] sm:$0xf]
  %v120 = vld [vmem:[%s3 + $0x28] sm:$0xf]
  %v121 = vld [vmem:[%s3 + $0x2c] sm:$0xf]
  %v122 = vld [vmem:[%s3 + $0x30] sm:$0xf]
  %v123 = vld [vmem:[%s3 + $0x34] sm:$0xf]
  %v124 = vld [vmem:[%s3 + $0x38] sm:$0xf]
  %v125 = vld [vmem:[%s3 + $0x3c] sm:$0xf]
  %v126 = vld [vmem:[%s4] sm:$0x1]
  %v128 = vperm.slane %v126, 0
  %v146 = vunpack.c.l.b16 %v110
  %v147 = vunpack.c.l.b16 %v111
  %v148 = vunpack.c.l.b16 %v112
  %v149 = vunpack.c.l.b16 %v113
  %v150 = vunpack.c.l.b16 %v114
  %v151 = vunpack.c.l.b16 %v115
  %v152 = vunpack.c.l.b16 %v116
  %v153 = vunpack.c.l.b16 %v117
  %v154 = vunpack.c.l.b16 %v118
  %v155 = vunpack.c.l.b16 %v119
  %v156 = vunpack.c.l.b16 %v120
  %v157 = vunpack.c.l.b16 %v121
  %v158 = vunpack.c.l.b16 %v122
  %v159 = vunpack.c.l.b16 %v123
  %v160 = vunpack.c.l.b16 %v124
  %v161 = vunpack.c.l.b16 %v125
  %v162 = vpack.c.b16 %v147, %v146
  %v163 = vpack.c.b16 %v149, %v148
  %v164 = vpack.c.b16 %v151, %v150
  %v165 = vpack.c.b16 %v153, %v152
  %v166 = vpack.c.b16 %v155, %v154
  %v167 = vpack.c.b16 %v157, %v156
  %v168 = vpack.c.b16 %v159, %v158
  %v169 = vpack.c.b16 %v161, %v160
  %178 = vmatpush.bf16.msra.mxu0 %v169
  %179 = vmatpush.bf16.msra.mxu0 %v168
  %180 = vmatpush.bf16.msra.mxu0 %v167
  %181 = vmatpush.bf16.msra.mxu0 %v166
  %182 = vmatpush.bf16.msra.mxu0 %v165
  %183 = vmatpush.bf16.msra.mxu0 %v164
  %184 = vmatpush.bf16.msra.mxu0 %v163
  %185 = vmatpush.bf16.msra.mxu0 %v162
  %186 = vmatmul.bf16.gmra.mxu0 %v109
  %v187 = vpop.f32.mrf.mxu0
  %v188 = vadd.f32 %v128, %v187
  %v189 = vpop.f32.mrf.mxu0
  %190 = vdwg.mxu0
  %v191 = vmax.f32 %v188, 0.0
  %v192 = vpack.c.bf16 %v191, %v191
  %v193 = vld [vmem:[%s5] sm:$0xf]
  %v194 = vld [vmem:[%s5 + $0x4] sm:$0xf]
  %v195 = vld [vmem:[%s5 + $0x8] sm:$0xf]
  %v196 = vld [vmem:[%s5 + $0xc] sm:$0xf]
  %v197 = vld [vmem:[%s5 + $0x10] sm:$0xf]
  %v198 = vld [vmem:[%s5 + $0x14] sm:$0xf]
  %v199 = vld [vmem:[%s5 + $0x18] sm:$0xf]
  %v200 = vld [vmem:[%s5 + $0x1c] sm:$0xf]
  %v201 = vld [vmem:[%s5 + $0x20] sm:$0xf]
  %v202 = vld [vmem:[%s5 + $0x24] sm:$0xf]
  %v203 = vld [vmem:[%s5 + $0x28] sm:$0xf]
  %v204 = vld [vmem:[%s5 + $0x2c] sm:$0xf]
  %v205 = vld [vmem:[%s5 + $0x30] sm:$0xf]
  %v206 = vld [vmem:[%s5 + $0x34] sm:$0xf]
  %v207 = vld [vmem:[%s5 + $0x38] sm:$0xf]
  %v208 = vld [vmem:[%s5 + $0x3c] sm:$0xf]
  %v209 = vld [vmem:[%s6] sm:$0x1]
  %v211 = vperm.slane %v209, 0
  %v229 = vunpack.c.l.b16 %v193
  %v230 = vunpack.c.l.b16 %v194
  %v231 = vunpack.c.l.b16 %v195
  %v232 = vunpack.c.l.b16 %v196
  %v233 = vunpack.c.l.b16 %v197
  %v234 = vunpack.c.l.b16 %v198
  %v235 = vunpack.c.l.b16 %v199
  %v236 = vunpack.c.l.b16 %v200
  %v237 = vunpack.c.l.b16 %v201
  %v238 = vunpack.c.l.b16 %v202
  %v239 = vunpack.c.l.b16 %v203
  %v240 = vunpack.c.l.b16 %v204
  %v241 = vunpack.c.l.b16 %v205
  %v242 = vunpack.c.l.b16 %v206
  %v243 = vunpack.c.l.b16 %v207
  %v244 = vunpack.c.l.b16 %v208
  %v245 = vpack.c.b16 %v230, %v229
  %v246 = vpack.c.b16 %v232, %v231
  %v247 = vpack.c.b16 %v234, %v233
  %v248 = vpack.c.b16 %v236, %v235
  %v249 = vpack.c.b16 %v238, %v237
  %v250 = vpack.c.b16 %v240, %v239
  %v251 = vpack.c.b16 %v242, %v241
  %v252 = vpack.c.b16 %v244, %v243
  %261 = vmatpush.bf16.msra.mxu0 %v252
  %262 = vmatpush.bf16.msra.mxu0 %v251
  %263 = vmatpush.bf16.msra.mxu0 %v250
  %264 = vmatpush.bf16.msra.mxu0 %v249
  %265 = vmatpush.bf16.msra.mxu0 %v248
  %266 = vmatpush.bf16.msra.mxu0 %v247
  %267 = vmatpush.bf16.msra.mxu0 %v246
  %268 = vmatpush.bf16.msra.mxu0 %v245
  %269 = vmatmul.bf16.gmra.mxu0 %v192
  %v270 = vpop.f32.mrf.mxu0
  %v271 = vadd.f32 %v211, %v270
  %v272 = vpop.f32.mrf.mxu0
  %273 = vdwg.mxu0
  %274 = vst [vmem:[%s7] sm:$0xff] %v271
  // Predicated region
  $region30: #{policy_forward.1} parent=0 // pred_check
    _
  $region31: #{policy_forward.1} parent=0 // pred_check_branch
    %276 = sbr.rel (0) target = $region33
  $region32: #{policy_forward.1} parent=0 // pred_region
    _
  $region33: #{policy_forward.1} parent=0 // pred_fallthru
    _
  // Predicated region
  $region34: #{policy_forward.1} parent=0 // pred_check
    _
  $region35: #{policy_forward.1} parent=0 // pred_check_branch
    %278 = sbr.rel (0) target = $region37
  $region36: #{policy_forward.1} parent=0 // pred_region
    _
  $region37: #{policy_forward.1} parent=0 // pred_fallthru
    _

</llo_original>
